<compile_context>
chip_gen: v7x
topology: tpu7x:2x2x1
jax: 0.10.0
libtpu: 0.0.40
codegen_flags: <defaults>
</compile_context>

<pallas_src>
import functools
import math

import jax
import jax.numpy as jnp
from jax.experimental import pallas as pl
from jax.experimental.pallas import tpu as pltpu

# ----------------------------- config -----------------------------
BATCH = 2
HID_DIM = 32                     # args['hidDim']
SAMPLE_LEN = 9                   # args['sampleLen']
NUM_K = 2                        # args['num_k']
SEQ_LEN = SAMPLE_LEN - NUM_K + 1     # 8
NUM_LINEAR = 3                   # args['num_linear']
OUTPUT_SIZE = 4                  # args['outputSize']
LIN_SIZE0 = HID_DIM * SEQ_LEN    # 256
NEG_SLOPE = 0.01                 # nn.LeakyReLU() default negative_slope
LANE_PAD = 128                   # lane-dense width for all layer outputs


def layer_sizes():
    """[256, 128, 64, OUTPUT_SIZE] — mirrors the PyTorch constructor loop."""
    sizes = [LIN_SIZE0]
    s = LIN_SIZE0
    for _ in range(NUM_LINEAR - 1):
        s = int(s / 2)
        sizes.append(s)
    sizes.append(OUTPUT_SIZE)
    return sizes


# ------------------- Pallas kernel: fully fused MLP head -------------------
def _decoder_kernel(layer_rows, x_ref, w_ref, b_ref, o_ref):
    """layer_rows: static tuple of (row_offset, k_rows) per layer into w_ref.

    x_ref:  (B, linSize0)          f32
    w_ref:  (sum_k, LANE_PAD)      bf16  — zero-padded, lane-dense weight slab
    b_ref:  (8, LANE_PAD)          f32   — row i = bias of layer i, zero-padded
    o_ref:  (B, LANE_PAD)          f32   — first OUTPUT_SIZE lanes are the result
    """
    num_layers = len(layer_rows)
    h = x_ref[...]                                           # f32 activations
    for i, (off, k) in enumerate(layer_rows):                # static unroll (3 iters)
        w = w_ref[off:off + k, :]                            # static view, bf16
        h = jnp.dot(h.astype(jnp.bfloat16), w,
                    preferred_element_type=jnp.float32)      # MXU, f32 accumulate
        h = h + b_ref[i:i + 1, :]                            # f32 bias (VPU)
        if i < num_layers - 1:                               # LeakyReLU between layers
            h = jnp.where(h > 0.0, h, NEG_SLOPE * h)         # f32 (VPU)
    o_ref[...] = h                                           # lane-dense unmasked store


def decoder_pallas(x, w_slab, b_slab, layer_rows):
    """x: (B, linSize0) f32; w_slab: (sum_k, 128) bf16; b_slab: (8, 128) f32."""
    bsz = x.shape[0]
    vmem = pl.BlockSpec(memory_space=pltpu.MemorySpace.VMEM)
    return pl.pallas_call(
        functools.partial(_decoder_kernel, layer_rows),
        out_shape=jax.ShapeDtypeStruct((bsz, LANE_PAD), jnp.float32),
        in_specs=[vmem, vmem, vmem],      # whole arrays resident in VMEM, no pipeline
        out_specs=vmem,
    )(x, w_slab, b_slab)


@functools.partial(jax.jit, static_argnums=(3,))
def decoder_forward(enc_outputs, w_slab, b_slab, layer_rows):
    bsz = enc_outputs.shape[0]
    x = enc_outputs.reshape(bsz, -1)                         # torch: reshape(batch, -1)
    out_pad = decoder_pallas(x, w_slab, b_slab, layer_rows)  # fused Linear/LeakyReLU stack
    out = out_pad[:, :OUTPUT_SIZE]                           # drop lane padding
    return jnp.squeeze(out)                                  # torch.squeeze(...)


# ------------------- params (PyTorch nn.Linear-style init) -------------------
def init_params(key):
    sizes = layer_sizes()
    weights, biases = [], []
    for i in range(len(sizes) - 1):
        key, wk, bk = jax.random.split(key, 3)
        fan_in, fan_out = sizes[i], sizes[i + 1]
        bound = 1.0 / math.sqrt(fan_in)
        # stored pre-transposed to [in, out] so the kernel computes y = x @ W + b
        weights.append(jax.random.uniform(wk, (fan_in, fan_out), jnp.float32,
                                          minval=-bound, maxval=bound))
        biases.append(jax.random.uniform(bk, (fan_out,), jnp.float32,
                                         minval=-bound, maxval=bound))
    return weights, biases


def pack_params(weights, biases):
    """Pack per-layer weights/biases into single lane-dense slabs.

    Weight slab rows: layer0 uses its true K (=256, x width); every later layer
    consumes the padded 128-wide activation, so its K is padded to 128 with
    zero rows (extra activation lanes are zero anyway).  All Ns padded to 128.
    """
    num_layers = len(weights)
    for w in weights[1:]:
        assert w.shape[1] <= LANE_PAD and w.shape[0] <= LANE_PAD
    k_pads, row_offs, off = [], [], 0
    for i, w in enumerate(weights):
        k_pad = w.shape[0] if i == 0 else LANE_PAD
        k_pads.append(k_pad)
        row_offs.append(off)
        off += k_pad
    w_slab = jnp.zeros((off, LANE_PAD), jnp.float32)
    b_slab = jnp.zeros((8, LANE_PAD), jnp.float32)
    for i, (w, b) in enumerate(zip(weights, biases)):
        k, n = w.shape
        w_slab = w_slab.at[row_offs[i]:row_offs[i] + k, :n].set(w)
        b_slab = b_slab.at[i, :n].set(b)
    layer_rows = tuple((row_offs[i], k_pads[i]) for i in range(num_layers))
    return w_slab.astype(jnp.bfloat16), b_slab, layer_rows


# ----------------------------- reference -----------------------------
def reference_forward(enc_outputs, weights, biases):
    bsz = enc_outputs.shape[0]
    h = enc_outputs.reshape(bsz, -1)
    for i, (w, b) in enumerate(zip(weights, biases)):
        h = h @ w + b
        if i < len(weights) - 1:
            h = jnp.where(h > 0.0, h, NEG_SLOPE * h)
    return jnp.squeeze(h)


# ----------------------------- main -----------------------------
if __name__ == "__main__":
    key = jax.random.PRNGKey(0)
    pkey, xkey = jax.random.split(key)
    weights, biases = init_params(pkey)
    w_slab, b_slab, layer_rows = pack_params(weights, biases)

    # enc_outputs: [batch, seq_len, hidDim] as produced by the upstream encoder
    enc_outputs = jax.random.normal(xkey, (BATCH, SEQ_LEN, HID_DIM), dtype=jnp.float32)

    out = decoder_forward(enc_outputs, w_slab, b_slab, layer_rows)
    out = jax.block_until_ready(out)

    ref = reference_forward(enc_outputs, weights, biases)

    assert out.shape == (BATCH, OUTPUT_SIZE), out.shape
    assert bool(jnp.all(jnp.isfinite(out)))
    # bf16 weights vs f32 reference: generous tolerance
    assert bool(jnp.allclose(out, ref, rtol=5e-2, atol=5e-2)), (out, ref)
    print("KERNEL_OK")
</pallas_src>

<mosaic_0001>
module attributes {stable_mosaic.version = 11 : i64} {
  func.func @_decoder_kernel(%arg0: memref<2x256xf32, #tpu.memory_space<vmem>>, %arg1: memref<512x128xbf16, #tpu.memory_space<vmem>>, %arg2: memref<8x128xf32, #tpu.memory_space<vmem>>, %arg3: memref<2x128xf32, #tpu.memory_space<vmem>>) attributes {dimension_semantics = [], scalar_prefetch = 0 : i64, scratch_operands = 0 : i64, tpu.core_type = #tpu.core_type<tc>} {
    %c0 = arith.constant 0 : index
    %c0_0 = arith.constant 0 : index
    %0 = vector.load %arg0[%c0, %c0_0] : memref<2x256xf32, #tpu.memory_space<vmem>>, vector<2x256xf32>
    %c0_1 = arith.constant 0 : index
    %c0_2 = arith.constant 0 : index
    %1 = vector.load %arg1[%c0_1, %c0_2] : memref<512x128xbf16, #tpu.memory_space<vmem>>, vector<256x128xbf16>
    %2 = arith.truncf %0 : vector<2x256xf32> to vector<2x256xbf16>
    %cst = arith.constant dense<0.000000e+00> : vector<2x128xf32>
    %3 = tpu.matmul %2, %1, %cst {dimension_numbers = #tpu.dot_dimension_numbers<[1], [0], [0], [1], [0, 0, 1, 1], [], []>} : vector<2x256xbf16>, vector<256x128xbf16>, vector<2x128xf32> -> vector<2x128xf32>
    %c0_3 = arith.constant 0 : index
    %c0_4 = arith.constant 0 : index
    %4 = vector.load %arg2[%c0_3, %c0_4] : memref<8x128xf32, #tpu.memory_space<vmem>>, vector<1x128xf32>
    %5 = vector.broadcast %4 : vector<1x128xf32> to vector<2x128xf32>
    %6 = arith.addf %3, %5 : vector<2x128xf32>
    %cst_5 = arith.constant 0.000000e+00 : f32
    %7 = vector.broadcast %cst_5 : f32 to vector<2x128xf32>
    %8 = arith.cmpf ogt, %6, %7 : vector<2x128xf32>
    %cst_6 = arith.constant 0.00999999977 : f32
    %9 = vector.broadcast %cst_6 : f32 to vector<2x128xf32>
    %10 = arith.mulf %9, %6 : vector<2x128xf32>
    %11 = arith.select %8, %6, %10 : vector<2x128xi1>, vector<2x128xf32>
    %c256 = arith.constant 256 : index
    %c0_7 = arith.constant 0 : index
    %12 = vector.load %arg1[%c256, %c0_7] : memref<512x128xbf16, #tpu.memory_space<vmem>>, vector<128x128xbf16>
    %13 = arith.truncf %11 : vector<2x128xf32> to vector<2x128xbf16>
    %cst_8 = arith.constant dense<0.000000e+00> : vector<2x128xf32>
    %14 = tpu.matmul %13, %12, %cst_8 {dimension_numbers = #tpu.dot_dimension_numbers<[1], [0], [0], [1], [0, 0, 1, 1], [], []>} : vector<2x128xbf16>, vector<128x128xbf16>, vector<2x128xf32> -> vector<2x128xf32>
    %c1 = arith.constant 1 : index
    %c0_9 = arith.constant 0 : index
    %15 = vector.load %arg2[%c1, %c0_9] : memref<8x128xf32, #tpu.memory_space<vmem>>, vector<1x128xf32>
    %16 = vector.broadcast %15 : vector<1x128xf32> to vector<2x128xf32>
    %17 = arith.addf %14, %16 : vector<2x128xf32>
    %cst_10 = arith.constant 0.000000e+00 : f32
    %18 = vector.broadcast %cst_10 : f32 to vector<2x128xf32>
    %19 = arith.cmpf ogt, %17, %18 : vector<2x128xf32>
    %cst_11 = arith.constant 0.00999999977 : f32
    %20 = vector.broadcast %cst_11 : f32 to vector<2x128xf32>
    %21 = arith.mulf %20, %17 : vector<2x128xf32>
    %22 = arith.select %19, %17, %21 : vector<2x128xi1>, vector<2x128xf32>
    %c384 = arith.constant 384 : index
    %c0_12 = arith.constant 0 : index
    %23 = vector.load %arg1[%c384, %c0_12] : memref<512x128xbf16, #tpu.memory_space<vmem>>, vector<128x128xbf16>
    %24 = arith.truncf %22 : vector<2x128xf32> to vector<2x128xbf16>
    %cst_13 = arith.constant dense<0.000000e+00> : vector<2x128xf32>
    %25 = tpu.matmul %24, %23, %cst_13 {dimension_numbers = #tpu.dot_dimension_numbers<[1], [0], [0], [1], [0, 0, 1, 1], [], []>} : vector<2x128xbf16>, vector<128x128xbf16>, vector<2x128xf32> -> vector<2x128xf32>
    %c2 = arith.constant 2 : index
    %c0_14 = arith.constant 0 : index
    %26 = vector.load %arg2[%c2, %c0_14] : memref<8x128xf32, #tpu.memory_space<vmem>>, vector<1x128xf32>
    %27 = vector.broadcast %26 : vector<1x128xf32> to vector<2x128xf32>
    %28 = arith.addf %25, %27 : vector<2x128xf32>
    %c0_15 = arith.constant 0 : index
    %c0_16 = arith.constant 0 : index
    %29 = vector.load %arg3[%c0_15, %c0_16] : memref<2x128xf32, #tpu.memory_space<vmem>>, vector<2x128xf32>
    tpu.vector_store %arg3[%c0_15, %c0_16], %28 {strides = array<i32>} : memref<2x128xf32, #tpu.memory_space<vmem>>, vector<2x128xf32>,
    return
  }
}

</mosaic_0001>

<llo_original>
// kernel: decoder_forward.1
$region0: #{decoder_forward.1}
  #allocation0 [shape = 'u32[]', space=smem, size = 0x4, offset = 0x4, fixed_abs, tag = 'smem constant byte address 0x4 - core index']
  #allocation1 [shape = 'u32[144,128]{1,0:T(1,128)}', space=vmem, size = 0x12000, scoped, tag = 'internal scratch']
  %s0 = inlined_call_operand.vmem [shape: f32[2,256], index: 0, kind: input, shape index: {}]
  %s1 = inlined_call_operand.hbm [shape: bf16[512,128], index: 1, kind: input, shape index: {}]
  %s2 = inlined_call_operand.vmem [shape: f32[8,128], index: 2, kind: input, shape index: {}]
  %s3 = inlined_call_operand.hbm [shape: f32[2,128], index: 3, kind: output, shape index: {}]
  %s4 = sld [smem:[#allocation0]]
  $region26: #{decoder_forward.1} parent=0
    _
  %s6 = ssub.s32 1, %s4
  %s7 = scalar_select 0, %s6, %s4
  $region1: #{decoder_forward.1} parent=0
    #allocation2 [shape = 'u8[131072]{0}', space=vmem, size = 0x20000, scoped, tag = 'input window, operand 1, single buffered']
    #allocation3 [shape = 's32[1]{0}', space=sflag, size = 0x4, scoped, tag = 'scoped memory for decoder_forward.1']
    #allocation4 [shape = 's32[1]{0}', space=sflag, size = 0x4, scoped, tag = 'scoped memory for decoder_forward.1']
    #allocation5 [shape = 'u8[1024]{0}', space=vmem, size = 0x400, scoped, tag = 'output window, operand 0, single buffered']
    %8 = vsyncpa [#allocation3], 0
    %9 = vsyncpa [#allocation4], 0
    // Predicated region
    $region2: #{decoder_forward.1} parent=1 // pred_check
      _
    $region3: #{decoder_forward.1} parent=1 // pred_check_branch
      %11 = sbr.rel (0) target = $region5
    $region4: #{decoder_forward.1} parent=1 // pred_region
      _
    $region5: #{decoder_forward.1} parent=1 // pred_fallthru
      _
    // Predicated region
    $region6: #{decoder_forward.1} parent=1 // pred_check
      _
    $region7: #{decoder_forward.1} parent=1 // pred_check_branch
      %13 = sbr.rel (0) target = $region9
    $region8: #{decoder_forward.1} parent=1 // pred_region
      %s15 = ssub.s32 4096, 4096
      %16 = vsyncadd [#allocation3], %s15
      %s17 = sshll.u32 [#allocation2], 4
      %s18 = int_to_ptr.vmem [resolvable:$true] %s17
      %23 = dma.hbm_to_vmem [thread:$0]  %s1, 4096, %s18, [#allocation3], 64, 64, 4
    $region9: #{decoder_forward.1} parent=1 // pred_fallthru
      _
    // Predicated region
    $region10: #{decoder_forward.1} parent=1 // pred_check
      _
    $region11: #{decoder_forward.1} parent=1 // pred_check_branch
      %25 = sbr.rel (0) target = $region13
    $region12: #{decoder_forward.1} parent=1 // pred_region
      _
    $region13: #{decoder_forward.1} parent=1 // pred_fallthru
      _
    // Predicated region
    $region14: #{decoder_forward.1} parent=1 // pred_check
      _
    $region15: #{decoder_forward.1} parent=1 // pred_check_branch
      %27 = sbr.rel (0) target = $region17
    $region16: #{decoder_forward.1} parent=1 // pred_region
      %28 = dma.done [#allocation3], 4096
    $region17: #{decoder_forward.1} parent=1 // pred_fallthru
      _
    %v30 = vld [vmem:[%s0] sm:$0xf]
    %v31 = vld [vmem:[#allocation2] sm:$0xf]
    %v32 = vld [vmem:[#allocation2 + $0x4] sm:$0xf]
    %v33 = vld [vmem:[#allocation2 + $0x8] sm:$0xf]
    %v34 = vld [vmem:[#allocation2 + $0xc] sm:$0xf]
    %v35 = vld [vmem:[#allocation2 + $0x10] sm:$0xf]
    %v36 = vld [vmem:[#allocation2 + $0x14] sm:$0xf]
    %v37 = vld [vmem:[#allocation2 + $0x18] sm:$0xf]
    %v38 = vld [vmem:[#allocation2 + $0x1c] sm:$0xf]
    %v39 = vld [vmem:[#allocation2 + $0x20] sm:$0xf]
    %v40 = vld [vmem:[#allocation2 + $0x24] sm:$0xf]
    %v41 = vld [vmem:[#allocation2 + $0x28] sm:$0xf]
    %v42 = vld [vmem:[#allocation2 + $0x2c] sm:$0xf]
    %v43 = vld [vmem:[#allocation2 + $0x30] sm:$0xf]
    %v44 = vld [vmem:[#allocation2 + $0x34] sm:$0xf]
    %v45 = vld [vmem:[#allocation2 + $0x38] sm:$0xf]
    %v46 = vld [vmem:[#allocation2 + $0x3c] sm:$0xf]
    %v47 = vld [vmem:[#allocation2 + $0x40] sm:$0xf]
    %v48 = vld [vmem:[#allocation2 + $0x44] sm:$0xf]
    %v49 = vld [vmem:[#allocation2 + $0x48] sm:$0xf]
    %v50 = vld [vmem:[#allocation2 + $0x4c] sm:$0xf]
    %v51 = vld [vmem:[#allocation2 + $0x50] sm:$0xf]
    %v52 = vld [vmem:[#allocation2 + $0x54] sm:$0xf]
    %v53 = vld [vmem:[#allocation2 + $0x58] sm:$0xf]
    %v54 = vld [vmem:[#allocation2 + $0x5c] sm:$0xf]
    %v55 = vld [vmem:[#allocation2 + $0x60] sm:$0xf]
    %v56 = vld [vmem:[#allocation2 + $0x64] sm:$0xf]
    %v57 = vld [vmem:[#allocation2 + $0x68] sm:$0xf]
    %v58 = vld [vmem:[#allocation2 + $0x6c] sm:$0xf]
    %v59 = vld [vmem:[#allocation2 + $0x70] sm:$0xf]
    %v60 = vld [vmem:[#allocation2 + $0x74] sm:$0xf]
    %v61 = vld [vmem:[#allocation2 + $0x78] sm:$0xf]
    %v62 = vld [vmem:[#allocation2 + $0x7c] sm:$0xf]
    %v65 = vunpack.c.l.s4 1983009808
    %v66 = vunpack.c.0.s8 %v65
    %v67 = vlaneseq
    %v68 = vshrl.u32 %v67, 7
    %v69 = vsub.s32 %v66, %v68
    %v70 = vrot.slane %v30, %v69
    %v71 = vcombine.high %v70, %v70
    %v74 = vpack.c.bf16 %v70, %v70
    %v75 = vpack.c.bf16 %v71, %v71
    %v76 = vld [vmem:[%s2] sm:$0x1]
    %v77 = vlaneseq
    %v78 = vshrl.u32 %v77, 7
    %v79 = vsub.s32 0, %v78
    %v80 = vrot.slane %v76, %v79
    %v113 = vunpack.c.l.b16 %v31
    %v114 = vunpack.c.l.b16 %v32
    %v115 = vunpack.c.l.b16 %v33
    %v116 = vunpack.c.l.b16 %v34
    %v117 = vunpack.c.l.b16 %v35
    %v118 = vunpack.c.l.b16 %v36
    %v119 = vunpack.c.l.b16 %v37
    %v120 = vunpack.c.l.b16 %v38
    %v121 = vunpack.c.l.b16 %v39
    %v122 = vunpack.c.l.b16 %v40
    %v123 = vunpack.c.l.b16 %v41
    %v124 = vunpack.c.l.b16 %v42
    %v125 = vunpack.c.l.b16 %v43
    %v126 = vunpack.c.l.b16 %v44
    %v127 = vunpack.c.l.b16 %v45
    %v128 = vunpack.c.l.b16 %v46
    %v129 = vunpack.c.l.b16 %v47
    %v130 = vunpack.c.l.b16 %v48
    %v131 = vunpack.c.l.b16 %v49
    %v132 = vunpack.c.l.b16 %v50
    %v133 = vunpack.c.l.b16 %v51
    %v134 = vunpack.c.l.b16 %v52
    %v135 = vunpack.c.l.b16 %v53
    %v136 = vunpack.c.l.b16 %v54
    %v137 = vunpack.c.l.b16 %v55
    %v138 = vunpack.c.l.b16 %v56
    %v139 = vunpack.c.l.b16 %v57
    %v140 = vunpack.c.l.b16 %v58
    %v141 = vunpack.c.l.b16 %v59
    %v142 = vunpack.c.l.b16 %v60
    %v143 = vunpack.c.l.b16 %v61
    %v144 = vunpack.c.l.b16 %v62
    %v145 = vpack.c.b16 %v114, %v113
    %v146 = vpack.c.b16 %v116, %v115
    %v147 = vpack.c.b16 %v118, %v117
    %v148 = vpack.c.b16 %v120, %v119
    %v149 = vpack.c.b16 %v122, %v121
    %v150 = vpack.c.b16 %v124, %v123
    %v151 = vpack.c.b16 %v126, %v125
    %v152 = vpack.c.b16 %v128, %v127
    %v153 = vpack.c.b16 %v130, %v129
    %v154 = vpack.c.b16 %v132, %v131
    %v155 = vpack.c.b16 %v134, %v133
    %v156 = vpack.c.b16 %v136, %v135
    %v157 = vpack.c.b16 %v138, %v137
    %v158 = vpack.c.b16 %v140, %v139
    %v159 = vpack.c.b16 %v142, %v141
    %v160 = vpack.c.b16 %v144, %v143
    %177 = vmatprep.subr.bf16.mxu0 0
    %178 = vmatpush1.bf16.msra.mxu0 %v145
    %179 = vmatprep.subr.bf16.mxu0 0
    %180 = vmatpush1.bf16.msra.mxu0 %v146
    %181 = vmatprep.subr.bf16.mxu0 0
    %182 = vmatpush1.bf16.msra.mxu0 %v147
    %183 = vmatprep.subr.bf16.mxu0 0
    %184 = vmatpush1.bf16.msra.mxu0 %v148
    %185 = vmatprep.subr.bf16.mxu0 0
    %186 = vmatpush1.bf16.msra.mxu0 %v149
    %187 = vmatprep.subr.bf16.mxu0 0
    %188 = vmatpush1.bf16.msra.mxu0 %v150
    %189 = vmatprep.subr.bf16.mxu0 0
    %190 = vmatpush1.bf16.msra.mxu0 %v151
    %191 = vmatprep.subr.bf16.mxu0 0
    %192 = vmatpush1.bf16.msra.mxu0 %v152
    %193 = vmatprep.subr.bf16.mxu0 0
    %194 = vmatpush1.bf16.msra.mxu0 %v153
    %195 = vmatprep.subr.bf16.mxu0 0
    %196 = vmatpush1.bf16.msra.mxu0 %v154
    %197 = vmatprep.subr.bf16.mxu0 0
    %198 = vmatpush1.bf16.msra.mxu0 %v155
    %199 = vmatprep.subr.bf16.mxu0 0
    %200 = vmatpush1.bf16.msra.mxu0 %v156
    %201 = vmatprep.subr.bf16.mxu0 0
    %202 = vmatpush1.bf16.msra.mxu0 %v157
    %203 = vmatprep.subr.bf16.mxu0 0
    %204 = vmatpush1.bf16.msra.mxu0 %v158
    %205 = vmatprep.subr.bf16.mxu0 0
    %206 = vmatpush1.bf16.msra.mxu0 %v159
    %207 = vmatprep.subr.bf16.mxu0 0
    %208 = vmatpush1.bf16.msra.mxu0 %v160
    %209 = vmatprep.mubr.bf16.mxu0 %v75
    %210 = vmatmul.mubr.bf16.gmra.mrb[0].mxu0 %v74
    %v211 = vpop.f32.mrb[0].mxu0
    %v212 = vadd.f32 %v80, %v211
    %v213 = vpop.f32.mrb[0].mxu0
    %v214 = vpop.f32.mrb[0].mxu0
    %v215 = vpop.f32.mrb[0].mxu0
    %216 = vdwg.mxu0
    %vm217 = vcmp.gt.f32.partialorder %v212, 0.0
    %v218 = vmul.f32 %v212, 0.01
    %v219 = vsel %vm217, %v212, %v218
    %v220 = vld [vmem:[#allocation2 + $0x80] sm:$0xf]
    %v221 = vld [vmem:[#allocation2 + $0x84] sm:$0xf]
    %v222 = vld [vmem:[#allocation2 + $0x88] sm:$0xf]
    %v223 = vld [vmem:[#allocation2 + $0x8c] sm:$0xf]
    %v224 = vld [vmem:[#allocation2 + $0x90] sm:$0xf]
    %v225 = vld [vmem:[#allocation2 + $0x94] sm:$0xf]
    %v226 = vld [vmem:[#allocation2 + $0x98] sm:$0xf]
    %v227 = vld [vmem:[#allocation2 + $0x9c] sm:$0xf]
    %v228 = vld [vmem:[#allocation2 + $0xa0] sm:$0xf]
    %v229 = vld [vmem:[#allocation2 + $0xa4] sm:$0xf]
    %v230 = vld [vmem:[#allocation2 + $0xa8] sm:$0xf]
    %v231 = vld [vmem:[#allocation2 + $0xac] sm:$0xf]
    %v232 = vld [vmem:[#allocation2 + $0xb0] sm:$0xf]
    %v233 = vld [vmem:[#allocation2 + $0xb4] sm:$0xf]
    %v234 = vld [vmem:[#allocation2 + $0xb8] sm:$0xf]
    %v235 = vld [vmem:[#allocation2 + $0xbc] sm:$0xf]
    %v236 = vpack.c.bf16 %v219, %v219
    %v237 = vld [vmem:[%s2 + $0x1] sm:$0x1]
    %v238 = vlaneseq
    %v239 = vshrl.u32 %v238, 7
    %v240 = vsub.s32 0, %v239
    %v241 = vrot.slane %v237, %v240
    %v258 = vunpack.c.l.b16 %v220
    %v259 = vunpack.c.l.b16 %v221
    %v260 = vunpack.c.l.b16 %v222
    %v261 = vunpack.c.l.b16 %v223
    %v262 = vunpack.c.l.b16 %v224
    %v263 = vunpack.c.l.b16 %v225
    %v264 = vunpack.c.l.b16 %v226
    %v265 = vunpack.c.l.b16 %v227
    %v266 = vunpack.c.l.b16 %v228
    %v267 = vunpack.c.l.b16 %v229
    %v268 = vunpack.c.l.b16 %v230
    %v269 = vunpack.c.l.b16 %v231
    %v270 = vunpack.c.l.b16 %v232
    %v271 = vunpack.c.l.b16 %v233
    %v272 = vunpack.c.l.b16 %v234
    %v273 = vunpack.c.l.b16 %v235
    %v274 = vpack.c.b16 %v259, %v258
    %v275 = vpack.c.b16 %v261, %v260
    %v276 = vpack.c.b16 %v263, %v262
    %v277 = vpack.c.b16 %v265, %v264
    %v278 = vpack.c.b16 %v267, %v266
    %v279 = vpack.c.b16 %v269, %v268
    %v280 = vpack.c.b16 %v271, %v270
    %v281 = vpack.c.b16 %v273, %v272
    %290 = vmatprep.subr.bf16.mxu0 0
    %291 = vmatpush1.bf16.msra.mxu0 %v274
    %292 = vmatprep.subr.bf16.mxu0 0
    %293 = vmatpush1.bf16.msra.mxu0 %v275
    %294 = vmatprep.subr.bf16.mxu0 0
    %295 = vmatpush1.bf16.msra.mxu0 %v276
    %296 = vmatprep.subr.bf16.mxu0 0
    %297 = vmatpush1.bf16.msra.mxu0 %v277
    %298 = vmatprep.subr.bf16.mxu0 0
    %299 = vmatpush1.bf16.msra.mxu0 %v278
    %300 = vmatprep.subr.bf16.mxu0 0
    %301 = vmatpush1.bf16.msra.mxu0 %v279
    %302 = vmatprep.subr.bf16.mxu0 0
    %303 = vmatpush1.bf16.msra.mxu0 %v280
    %304 = vmatprep.subr.bf16.mxu0 0
    %305 = vmatpush1.bf16.msra.mxu0 %v281
    %306 = vmatprep.subr.bf16.mxu0 0
    %307 = vmatpush1.bf16.msra.mxu0 0
    %308 = vmatprep.subr.bf16.mxu0 0
    %309 = vmatpush1.bf16.msra.mxu0 0
    %310 = vmatprep.subr.bf16.mxu0 0
    %311 = vmatpush1.bf16.msra.mxu0 0
    %312 = vmatprep.subr.bf16.mxu0 0
    %313 = vmatpush1.bf16.msra.mxu0 0
    %314 = vmatprep.subr.bf16.mxu0 0
    %315 = vmatpush1.bf16.msra.mxu0 0
    %316 = vmatprep.subr.bf16.mxu0 0
    %317 = vmatpush1.bf16.msra.mxu0 0
    %318 = vmatprep.subr.bf16.mxu0 0
    %319 = vmatpush1.bf16.msra.mxu0 0
    %320 = vmatprep.subr.bf16.mxu0 0
    %321 = vmatpush1.bf16.msra.mxu0 0
    %322 = vmatprep.mubr.bf16.mxu0 0
    %323 = vmatmul.mubr.bf16.gmra.mrb[0].mxu0 %v236
    %v324 = vpop.f32.mrb[0].mxu0
    %v325 = vadd.f32 %v241, %v324
    %v326 = vpop.f32.mrb[0].mxu0
    %v327 = vpop.f32.mrb[0].mxu0
    %v328 = vpop.f32.mrb[0].mxu0
    %329 = vdwg.mxu0
    %vm330 = vcmp.gt.f32.partialorder %v325, 0.0
    %v331 = vmul.f32 %v325, 0.01
    %v332 = vsel %vm330, %v325, %v331
    %v333 = vld [vmem:[#allocation2 + $0xc0] sm:$0xf]
    %v334 = vld [vmem:[#allocation2 + $0xc4] sm:$0xf]
    %v335 = vld [vmem:[#allocation2 + $0xc8] sm:$0xf]
    %v336 = vld [vmem:[#allocation2 + $0xcc] sm:$0xf]
    %v337 = vld [vmem:[#allocation2 + $0xd0] sm:$0xf]
    %v338 = vld [vmem:[#allocation2 + $0xd4] sm:$0xf]
    %v339 = vld [vmem:[#allocation2 + $0xd8] sm:$0xf]
    %v340 = vld [vmem:[#allocation2 + $0xdc] sm:$0xf]
    %v341 = vld [vmem:[#allocation2 + $0xe0] sm:$0xf]
    %v342 = vld [vmem:[#allocation2 + $0xe4] sm:$0xf]
    %v343 = vld [vmem:[#allocation2 + $0xe8] sm:$0xf]
    %v344 = vld [vmem:[#allocation2 + $0xec] sm:$0xf]
    %v345 = vld [vmem:[#allocation2 + $0xf0] sm:$0xf]
    %v346 = vld [vmem:[#allocation2 + $0xf4] sm:$0xf]
    %v347 = vld [vmem:[#allocation2 + $0xf8] sm:$0xf]
    %v348 = vld [vmem:[#allocation2 + $0xfc] sm:$0xf]
    %v349 = vpack.c.bf16 %v332, %v332
    %v350 = vld [vmem:[%s2 + $0x2] sm:$0x1]
    %v351 = vlaneseq
    %v352 = vshrl.u32 %v351, 7
    %v353 = vsub.s32 0, %v352
    %v354 = vrot.slane %v350, %v353
    %v371 = vunpack.c.l.b16 %v333
    %v372 = vunpack.c.l.b16 %v334
    %v373 = vunpack.c.l.b16 %v335
    %v374 = vunpack.c.l.b16 %v336
    %v375 = vunpack.c.l.b16 %v337
    %v376 = vunpack.c.l.b16 %v338
    %v377 = vunpack.c.l.b16 %v339
    %v378 = vunpack.c.l.b16 %v340
    %v379 = vunpack.c.l.b16 %v341
    %v380 = vunpack.c.l.b16 %v342
    %v381 = vunpack.c.l.b16 %v343
    %v382 = vunpack.c.l.b16 %v344
    %v383 = vunpack.c.l.b16 %v345
    %v384 = vunpack.c.l.b16 %v346
    %v385 = vunpack.c.l.b16 %v347
    %v386 = vunpack.c.l.b16 %v348
    %v387 = vpack.c.b16 %v372, %v371
    %v388 = vpack.c.b16 %v374, %v373
    %v389 = vpack.c.b16 %v376, %v375
    %v390 = vpack.c.b16 %v378, %v377
    %v391 = vpack.c.b16 %v380, %v379
    %v392 = vpack.c.b16 %v382, %v381
    %v393 = vpack.c.b16 %v384, %v383
    %v394 = vpack.c.b16 %v386, %v385
    %403 = vmatprep.subr.bf16.mxu0 0
    %404 = vmatpush1.bf16.msra.mxu0 %v387
    %405 = vmatprep.subr.bf16.mxu0 0
    %406 = vmatpush1.bf16.msra.mxu0 %v388
    %407 = vmatprep.subr.bf16.mxu0 0
    %408 = vmatpush1.bf16.msra.mxu0 %v389
    %409 = vmatprep.subr.bf16.mxu0 0
    %410 = vmatpush1.bf16.msra.mxu0 %v390
    %411 = vmatprep.subr.bf16.mxu0 0
    %412 = vmatpush1.bf16.msra.mxu0 %v391
    %413 = vmatprep.subr.bf16.mxu0 0
    %414 = vmatpush1.bf16.msra.mxu0 %v392
    %415 = vmatprep.subr.bf16.mxu0 0
    %416 = vmatpush1.bf16.msra.mxu0 %v393
    %417 = vmatprep.subr.bf16.mxu0 0
    %418 = vmatpush1.bf16.msra.mxu0 %v394
    %419 = vmatprep.subr.bf16.mxu0 0
    %420 = vmatpush1.bf16.msra.mxu0 0
    %421 = vmatprep.subr.bf16.mxu0 0
    %422 = vmatpush1.bf16.msra.mxu0 0
    %423 = vmatprep.subr.bf16.mxu0 0
    %424 = vmatpush1.bf16.msra.mxu0 0
    %425 = vmatprep.subr.bf16.mxu0 0
    %426 = vmatpush1.bf16.msra.mxu0 0
    %427 = vmatprep.subr.bf16.mxu0 0
    %428 = vmatpush1.bf16.msra.mxu0 0
    %429 = vmatprep.subr.bf16.mxu0 0
    %430 = vmatpush1.bf16.msra.mxu0 0
    %431 = vmatprep.subr.bf16.mxu0 0
    %432 = vmatpush1.bf16.msra.mxu0 0
    %433 = vmatprep.subr.bf16.mxu0 0
    %434 = vmatpush1.bf16.msra.mxu0 0
    %435 = vmatprep.mubr.bf16.mxu0 0
    %436 = vmatmul.mubr.bf16.gmra.mrb[0].mxu0 %v349
    %v437 = vpop.f32.mrb[0].mxu0
    %v438 = vadd.f32 %v354, %v437
    %v439 = vpop.f32.mrb[0].mxu0
    %v440 = vpop.f32.mrb[0].mxu0
    %v441 = vpop.f32.mrb[0].mxu0
    %442 = vdwg.mxu0
    %443 = vst [vmem:[#allocation5] sm:$0x3] %v438
    // Predicated region
    $region18: #{decoder_forward.1} parent=1 // pred_check
      _
    $region19: #{decoder_forward.1} parent=1 // pred_check_branch
      %445 = sbr.rel (0) target = $region21
    $region20: #{decoder_forward.1} parent=1 // pred_region
      %s447 = ssub.s32 32, 32
      %448 = vsyncadd [#allocation4], %s447
      %s450 = sshll.u32 [#allocation5], 4
      %s451 = int_to_ptr.vmem [resolvable:$true] %s450
      %453 = dma.vmem_to_hbm [thread:$0]  %s451, 32, %s3, [#allocation4]
    $region21: #{decoder_forward.1} parent=1 // pred_fallthru
      _
    // Predicated region
    $region22: #{decoder_forward.1} parent=1 // pred_check
      _
    $region23: #{decoder_forward.1} parent=1 // pred_check_branch
      %455 = sbr.rel (0) target = $region25
    $region24: #{decoder_forward.1} parent=1 // pred_region
      %456 = dma.done [#allocation4], 32
    $region25: #{decoder_forward.1} parent=1 // pred_fallthru
      _
    %457 = vsyncpa [#allocation3], 1
    %458 = vsyncpa [#allocation4], 1

</llo_original>
